<compile_context>
chip_gen: v7x
topology: tpu7x:2x2x1
jax: 0.10.0
libtpu: 0.0.40
codegen_flags: <defaults>
</compile_context>

<pallas_src>
import functools

import jax
import jax.numpy as jnp
from jax.experimental import pallas as pl
from jax.experimental.pallas import tpu as pltpu

LEAKY_SLOPE = 0.01  # PyTorch nn.LeakyReLU default


def _round_up(x, m):
    return ((x + m - 1) // m) * m


def _leaky_relu(x):
    return jnp.where(x > 0, x, LEAKY_SLOPE * x)


def realnvp_fused_kernel(
    x_ref, mask_ref, scale_ref,
    w1_ref, b1_ref, w2_ref, b2_ref, w3_ref, b3_ref,
    y_ref, ldj_ref,
    *, d_pad, matmul_dtype,
):
    x = x_ref[...]               # (TB, Dp) f32
    mask = mask_ref[...]         # (1, Dp)  f32
    scale = scale_ref[...]       # (1, Dp)  f32
    x_mask = x * mask

    # Fused s/t MLP: three lane-dense matmuls on the MXU (f32 accumulation).
    h = jnp.dot(x_mask.astype(matmul_dtype), w1_ref[...],
                preferred_element_type=jnp.float32) + b1_ref[...]
    h = _leaky_relu(h)
    h = jnp.dot(h.astype(matmul_dtype), w2_ref[...],
                preferred_element_type=jnp.float32) + b2_ref[...]
    h = _leaky_relu(h)
    st = jnp.dot(h.astype(matmul_dtype), w3_ref[...],
                 preferred_element_type=jnp.float32) + b3_ref[...]   # (TB, 2*Dp)

    s = st[:, :d_pad] * scale    # (TB, Dp)  -- padded lanes are exactly 0
    t = st[:, d_pad:]            # (TB, Dp)

    one_minus_mask = 1.0 - mask
    y_ref[...] = x_mask + one_minus_mask * (x * jnp.exp(s) + t)

    ldj = jnp.sum(one_minus_mask * s, axis=-1, keepdims=True)        # (TB, 1)
    ldj_ref[...] = jnp.broadcast_to(ldj, ldj_ref.shape)              # lane-dense store


def _pack_fused_params(s_params, t_params, D, H, Dp, HF, matmul_dtype):
    """Pack the two MLPs into one block-structured 3-layer MLP (done once)."""
    Hh = HF // 2  # >= H by construction
    s_w1, s_b1, s_w2, s_b2, s_w3, s_b3 = s_params
    t_w1, t_b1, t_w2, t_b2, t_w3, t_b3 = t_params

    w1f = jnp.zeros((Dp, HF), jnp.float32)
    w1f = w1f.at[:D, :H].set(s_w1).at[:D, Hh:Hh + H].set(t_w1)
    b1f = jnp.zeros((1, HF), jnp.float32)
    b1f = b1f.at[0, :H].set(s_b1).at[0, Hh:Hh + H].set(t_b1)

    w2f = jnp.zeros((HF, HF), jnp.float32)
    w2f = w2f.at[:H, :H].set(s_w2).at[Hh:Hh + H, Hh:Hh + H].set(t_w2)
    b2f = jnp.zeros((1, HF), jnp.float32)
    b2f = b2f.at[0, :H].set(s_b2).at[0, Hh:Hh + H].set(t_b2)

    w3f = jnp.zeros((HF, 2 * Dp), jnp.float32)
    w3f = w3f.at[:H, :D].set(s_w3).at[Hh:Hh + H, Dp:Dp + D].set(t_w3)
    b3f = jnp.zeros((1, 2 * Dp), jnp.float32)
    b3f = b3f.at[0, :D].set(s_b3).at[0, Dp:Dp + D].set(t_b3)

    # Weights to the MXU dtype; biases stay f32 (added after f32 accumulation).
    return (w1f.astype(matmul_dtype), b1f,
            w2f.astype(matmul_dtype), b2f,
            w3f.astype(matmul_dtype), b3f)


def realnvp_forward(x, mask, scale, s_params, t_params, *,
                    block_b=512, matmul_dtype=jnp.bfloat16):
    """x: (B, D) float32. Returns (y (B, D), log_det_jac (B,))."""
    B, D = x.shape
    H = s_params[1].shape[0]

    Dp = _round_up(max(D, 128), 128)        # lane-dense feature dim
    HF = _round_up(max(2 * H, 128), 128)    # fused hidden dim (>= 2H)

    TB = min(block_b, _round_up(B, 8))      # batch tile (multiple of 8)
    Bp = _round_up(B, TB)

    # Zero-pad inputs; padded lanes/rows contribute exactly 0 everywhere.
    xp = jnp.zeros((Bp, Dp), jnp.float32).at[:B, :D].set(x.astype(jnp.float32))
    maskp = jnp.zeros((1, Dp), jnp.float32).at[0, :D].set(mask.astype(jnp.float32))
    scalep = jnp.zeros((1, Dp), jnp.float32).at[0, :D].set(scale.astype(jnp.float32))

    w1f, b1f, w2f, b2f, w3f, b3f = _pack_fused_params(
        s_params, t_params, D, H, Dp, HF, matmul_dtype)

    kernel = functools.partial(realnvp_fused_kernel, d_pad=Dp,
                               matmul_dtype=matmul_dtype)

    y_p, ldj_p = pl.pallas_call(
        kernel,
        out_shape=(
            jax.ShapeDtypeStruct((Bp, Dp), jnp.float32),
            jax.ShapeDtypeStruct((Bp, 128), jnp.float32),
        ),
        grid=(Bp // TB,),
        in_specs=[
            pl.BlockSpec((TB, Dp), lambda i: (i, 0)),        # x     (tiled over batch)
            pl.BlockSpec((1, Dp), lambda i: (0, 0)),         # mask  (resident)
            pl.BlockSpec((1, Dp), lambda i: (0, 0)),         # scale (resident)
            pl.BlockSpec((Dp, HF), lambda i: (0, 0)),        # fused w1
            pl.BlockSpec((1, HF), lambda i: (0, 0)),         # fused b1
            pl.BlockSpec((HF, HF), lambda i: (0, 0)),        # fused w2
            pl.BlockSpec((1, HF), lambda i: (0, 0)),         # fused b2
            pl.BlockSpec((HF, 2 * Dp), lambda i: (0, 0)),    # fused w3
            pl.BlockSpec((1, 2 * Dp), lambda i: (0, 0)),     # fused b3
        ],
        out_specs=(
            pl.BlockSpec((TB, Dp), lambda i: (i, 0)),        # y
            pl.BlockSpec((TB, 128), lambda i: (i, 0)),       # ldj (lane-dense slab)
        ),
        compiler_params=pltpu.CompilerParams(
            dimension_semantics=("parallel",),               # shard tiles across TCs (v7x)
            vmem_limit_bytes=32 * 1024 * 1024,               # safe on v5e/v6e/v7x
        ),
    )(xp, maskp, scalep, w1f, b1f, w2f, b2f, w3f, b3f)

    return y_p[:B, :D], ldj_p[:B, 0]


def _torch_linear_init(key, fan_in, fan_out):
    """Deterministic stand-in for nn.Linear default init: U(-1/sqrt(fan_in), ...)."""
    kw, kb = jax.random.split(key)
    bound = 1.0 / jnp.sqrt(fan_in)
    # Weight stored as (in, out) so kernel does x @ W (== PyTorch x @ W.T).
    w = jax.random.uniform(kw, (fan_in, fan_out), jnp.float32, -bound, bound)
    b = jax.random.uniform(kb, (fan_out,), jnp.float32, -bound, bound)
    return w, b


def make_mlp_params(key, dim, hidden):
    k1, k2, k3 = jax.random.split(key, 3)
    w1, b1 = _torch_linear_init(k1, dim, hidden)
    w2, b2 = _torch_linear_init(k2, hidden, hidden)
    w3, b3 = _torch_linear_init(k3, hidden, dim)
    return (w1, b1, w2, b2, w3, b3)


def reference_forward(x, mask, scale, s_params, t_params):
    """Pure-JAX f32 reference mirroring the PyTorch module."""
    def mlp(z, p):
        w1, b1, w2, b2, w3, b3 = p
        h = z @ w1 + b1
        h = jnp.where(h > 0, h, LEAKY_SLOPE * h)
        h2 = h @ w2 + b2
        h2 = jnp.where(h2 > 0, h2, LEAKY_SLOPE * h2)
        return h2 @ w3 + b3

    x_mask = x * mask
    s = mlp(x_mask, s_params) * scale
    t = mlp(x_mask, t_params)
    y = x_mask + (1 - mask) * (x * jnp.exp(s) + t)
    ldj = ((1 - mask) * s).sum(-1)
    return y, ldj


if __name__ == "__main__":
    B, D, H = 8, 4, 32  # batch, dim (= len(mask)), hidden_size

    key = jax.random.PRNGKey(0)
    k_x, k_scale, k_s, k_t = jax.random.split(key, 4)

    x = jax.random.normal(k_x, (B, D), jnp.float32)
    # Alternating binary mask, as typical for RealNVP coupling layers.
    mask = (jnp.arange(D) % 2).astype(jnp.float32)
    # self.scale = nn.Parameter(torch.Tensor(dim)) is uninitialized in PyTorch;
    # initialize deterministically with small random values here.
    scale = 0.1 * jax.random.normal(k_scale, (D,), jnp.float32)

    s_params = make_mlp_params(k_s, D, H)
    t_params = make_mlp_params(k_t, D, H)

    y, ldj = realnvp_forward(x, mask, scale, s_params, t_params)
    jax.block_until_ready((y, ldj))

    y_ref, ldj_ref = reference_forward(x, mask, scale, s_params, t_params)
    # bf16 MXU inputs with f32 accumulation -> relaxed tolerance vs f32 reference.
    assert jnp.allclose(y, y_ref, atol=2e-2, rtol=2e-2), (y, y_ref)
    assert jnp.allclose(ldj, ldj_ref, atol=2e-2, rtol=2e-2), (ldj, ldj_ref)

    print("KERNEL_OK")
</pallas_src>

<mosaic_0001>
module attributes {stable_mosaic.version = 11 : i64} {
  func.func @realnvp_fused_kernel(%arg0: i32, %arg1: memref<8x128xf32, #tpu.memory_space<vmem>>, %arg2: memref<1x128xf32, #tpu.memory_space<vmem>>, %arg3: memref<1x128xf32, #tpu.memory_space<vmem>>, %arg4: memref<128x128xbf16, #tpu.memory_space<vmem>>, %arg5: memref<1x128xf32, #tpu.memory_space<vmem>>, %arg6: memref<128x128xbf16, #tpu.memory_space<vmem>>, %arg7: memref<1x128xf32, #tpu.memory_space<vmem>>, %arg8: memref<128x256xbf16, #tpu.memory_space<vmem>>, %arg9: memref<1x256xf32, #tpu.memory_space<vmem>>, %arg10: memref<8x128xf32, #tpu.memory_space<vmem>>, %arg11: memref<8x128xf32, #tpu.memory_space<vmem>>) attributes {dimension_semantics = [#tpu.dimension_semantics<parallel>], iteration_bounds = array<i64: 1>, scalar_prefetch = 0 : i64, scratch_operands = 0 : i64, tpu.core_type = #tpu.core_type<tc>, window_params = [{transform_indices = @transform_0, window_bounds = array<i64: 8, 128>}, {pipeline_mode = #tpu.pipeline_mode<synchronous>, transform_indices = @transform_1, window_bounds = array<i64: 1, 128>}, {pipeline_mode = #tpu.pipeline_mode<synchronous>, transform_indices = @transform_2, window_bounds = array<i64: 1, 128>}, {pipeline_mode = #tpu.pipeline_mode<synchronous>, transform_indices = @transform_3, window_bounds = array<i64: 128, 128>}, {pipeline_mode = #tpu.pipeline_mode<synchronous>, transform_indices = @transform_4, window_bounds = array<i64: 1, 128>}, {pipeline_mode = #tpu.pipeline_mode<synchronous>, transform_indices = @transform_5, window_bounds = array<i64: 128, 128>}, {pipeline_mode = #tpu.pipeline_mode<synchronous>, transform_indices = @transform_6, window_bounds = array<i64: 1, 128>}, {pipeline_mode = #tpu.pipeline_mode<synchronous>, transform_indices = @transform_7, window_bounds = array<i64: 128, 256>}, {pipeline_mode = #tpu.pipeline_mode<synchronous>, transform_indices = @transform_8, window_bounds = array<i64: 1, 256>}, {transform_indices = @transform_9, window_bounds = array<i64: 8, 128>}, {transform_indices = @transform_10, window_bounds = array<i64: 8, 128>}]} {
    %c0 = arith.constant 0 : index
    %c0_0 = arith.constant 0 : index
    %0 = vector.load %arg1[%c0, %c0_0] : memref<8x128xf32, #tpu.memory_space<vmem>>, vector<8x128xf32>
    %c0_1 = arith.constant 0 : index
    %c0_2 = arith.constant 0 : index
    %1 = vector.load %arg2[%c0_1, %c0_2] : memref<1x128xf32, #tpu.memory_space<vmem>>, vector<1x128xf32>
    %c0_3 = arith.constant 0 : index
    %c0_4 = arith.constant 0 : index
    %2 = vector.load %arg3[%c0_3, %c0_4] : memref<1x128xf32, #tpu.memory_space<vmem>>, vector<1x128xf32>
    %3 = vector.broadcast %1 : vector<1x128xf32> to vector<8x128xf32>
    %4 = arith.mulf %0, %3 : vector<8x128xf32>
    %5 = arith.truncf %4 : vector<8x128xf32> to vector<8x128xbf16>
    %c0_5 = arith.constant 0 : index
    %c0_6 = arith.constant 0 : index
    %6 = vector.load %arg4[%c0_5, %c0_6] : memref<128x128xbf16, #tpu.memory_space<vmem>>, vector<128x128xbf16>
    %cst = arith.constant dense<0.000000e+00> : vector<8x128xf32>
    %7 = tpu.matmul %5, %6, %cst {dimension_numbers = #tpu.dot_dimension_numbers<[1], [0], [0], [1], [0, 0, 1, 1], [], []>} : vector<8x128xbf16>, vector<128x128xbf16>, vector<8x128xf32> -> vector<8x128xf32>
    %c0_7 = arith.constant 0 : index
    %c0_8 = arith.constant 0 : index
    %8 = vector.load %arg5[%c0_7, %c0_8] : memref<1x128xf32, #tpu.memory_space<vmem>>, vector<1x128xf32>
    %9 = vector.broadcast %8 : vector<1x128xf32> to vector<8x128xf32>
    %10 = arith.addf %7, %9 : vector<8x128xf32>
    %cst_9 = arith.constant 0.000000e+00 : f32
    %11 = vector.broadcast %cst_9 : f32 to vector<8x128xf32>
    %12 = arith.cmpf ogt, %10, %11 : vector<8x128xf32>
    %cst_10 = arith.constant 0.00999999977 : f32
    %13 = vector.broadcast %cst_10 : f32 to vector<8x128xf32>
    %14 = arith.mulf %13, %10 : vector<8x128xf32>
    %15 = arith.select %12, %10, %14 : vector<8x128xi1>, vector<8x128xf32>
    %16 = arith.truncf %15 : vector<8x128xf32> to vector<8x128xbf16>
    %c0_11 = arith.constant 0 : index
    %c0_12 = arith.constant 0 : index
    %17 = vector.load %arg6[%c0_11, %c0_12] : memref<128x128xbf16, #tpu.memory_space<vmem>>, vector<128x128xbf16>
    %cst_13 = arith.constant dense<0.000000e+00> : vector<8x128xf32>
    %18 = tpu.matmul %16, %17, %cst_13 {dimension_numbers = #tpu.dot_dimension_numbers<[1], [0], [0], [1], [0, 0, 1, 1], [], []>} : vector<8x128xbf16>, vector<128x128xbf16>, vector<8x128xf32> -> vector<8x128xf32>
    %c0_14 = arith.constant 0 : index
    %c0_15 = arith.constant 0 : index
    %19 = vector.load %arg7[%c0_14, %c0_15] : memref<1x128xf32, #tpu.memory_space<vmem>>, vector<1x128xf32>
    %20 = vector.broadcast %19 : vector<1x128xf32> to vector<8x128xf32>
    %21 = arith.addf %18, %20 : vector<8x128xf32>
    %cst_16 = arith.constant 0.000000e+00 : f32
    %22 = vector.broadcast %cst_16 : f32 to vector<8x128xf32>
    %23 = arith.cmpf ogt, %21, %22 : vector<8x128xf32>
    %cst_17 = arith.constant 0.00999999977 : f32
    %24 = vector.broadcast %cst_17 : f32 to vector<8x128xf32>
    %25 = arith.mulf %24, %21 : vector<8x128xf32>
    %26 = arith.select %23, %21, %25 : vector<8x128xi1>, vector<8x128xf32>
    %27 = arith.truncf %26 : vector<8x128xf32> to vector<8x128xbf16>
    %c0_18 = arith.constant 0 : index
    %c0_19 = arith.constant 0 : index
    %28 = vector.load %arg8[%c0_18, %c0_19] : memref<128x256xbf16, #tpu.memory_space<vmem>>, vector<128x256xbf16>
    %cst_20 = arith.constant dense<0.000000e+00> : vector<8x256xf32>
    %29 = tpu.matmul %27, %28, %cst_20 {dimension_numbers = #tpu.dot_dimension_numbers<[1], [0], [0], [1], [0, 0, 1, 1], [], []>} : vector<8x128xbf16>, vector<128x256xbf16>, vector<8x256xf32> -> vector<8x256xf32>
    %c0_21 = arith.constant 0 : index
    %c0_22 = arith.constant 0 : index
    %30 = vector.load %arg9[%c0_21, %c0_22] : memref<1x256xf32, #tpu.memory_space<vmem>>, vector<1x256xf32>
    %31 = vector.broadcast %30 : vector<1x256xf32> to vector<8x256xf32>
    %32 = arith.addf %29, %31 : vector<8x256xf32>
    %33 = vector.extract_strided_slice %32 {offsets = [0, 0], sizes = [8, 128], strides = [1, 1]} : vector<8x256xf32> to vector<8x128xf32>
    %34 = vector.broadcast %2 : vector<1x128xf32> to vector<8x128xf32>
    %35 = arith.mulf %33, %34 : vector<8x128xf32>
    %36 = vector.extract_strided_slice %32 {offsets = [0, 128], sizes = [8, 128], strides = [1, 1]} : vector<8x256xf32> to vector<8x128xf32>
    %cst_23 = arith.constant 1.000000e+00 : f32
    %37 = vector.broadcast %cst_23 : f32 to vector<1x128xf32>
    %38 = arith.subf %37, %1 : vector<1x128xf32>
    %39 = math.exp %35 : vector<8x128xf32>
    %40 = arith.mulf %0, %39 : vector<8x128xf32>
    %41 = arith.addf %40, %36 : vector<8x128xf32>
    %42 = vector.broadcast %38 : vector<1x128xf32> to vector<8x128xf32>
    %43 = arith.mulf %42, %41 : vector<8x128xf32>
    %44 = arith.addf %4, %43 : vector<8x128xf32>
    %c0_24 = arith.constant 0 : index
    %c0_25 = arith.constant 0 : index
    %45 = vector.load %arg10[%c0_24, %c0_25] : memref<8x128xf32, #tpu.memory_space<vmem>>, vector<8x128xf32>
    tpu.vector_store %arg10[%c0_24, %c0_25], %44 {strides = array<i32>} : memref<8x128xf32, #tpu.memory_space<vmem>>, vector<8x128xf32>,
    %46 = vector.broadcast %38 : vector<1x128xf32> to vector<8x128xf32>
    %47 = arith.mulf %46, %35 : vector<8x128xf32>
    %cst_26 = arith.constant dense<0.000000e+00> : vector<8xf32>
    %48 = vector.multi_reduction <add>, %47, %cst_26 [1] : vector<8x128xf32> to vector<8xf32>
    %49 = vector.shape_cast %48 : vector<8xf32> to vector<8x1xf32>
    %50 = vector.shape_cast %49 : vector<8x1xf32> to vector<8x1xf32>
    %51 = vector.broadcast %50 : vector<8x1xf32> to vector<8x128xf32>
    %c0_27 = arith.constant 0 : index
    %c0_28 = arith.constant 0 : index
    %52 = vector.load %arg11[%c0_27, %c0_28] : memref<8x128xf32, #tpu.memory_space<vmem>>, vector<8x128xf32>
    tpu.vector_store %arg11[%c0_27, %c0_28], %51 {strides = array<i32>} : memref<8x128xf32, #tpu.memory_space<vmem>>, vector<8x128xf32>,
    return
  }
  func.func @transform_0(%arg0: i32) -> (i32, i32) {
    %c0_i32 = arith.constant 0 : i32
    %c0_i32_0 = arith.constant 0 : i32
    return %arg0, %c0_i32 : i32, i32
  }
  func.func @transform_1(%arg0: i32) -> (i32, i32) {
    %c0_i32 = arith.constant 0 : i32
    %c0_i32_0 = arith.constant 0 : i32
    %c0_i32_1 = arith.constant 0 : i32
    return %c0_i32, %c0_i32_0 : i32, i32
  }
  func.func @transform_2(%arg0: i32) -> (i32, i32) {
    %c0_i32 = arith.constant 0 : i32
    %c0_i32_0 = arith.constant 0 : i32
    %c0_i32_1 = arith.constant 0 : i32
    return %c0_i32, %c0_i32_0 : i32, i32
  }
  func.func @transform_3(%arg0: i32) -> (i32, i32) {
    %c0_i32 = arith.constant 0 : i32
    %c0_i32_0 = arith.constant 0 : i32
    %c0_i32_1 = arith.constant 0 : i32
    return %c0_i32, %c0_i32_0 : i32, i32
  }
  func.func @transform_4(%arg0: i32) -> (i32, i32) {
    %c0_i32 = arith.constant 0 : i32
    %c0_i32_0 = arith.constant 0 : i32
    %c0_i32_1 = arith.constant 0 : i32
    return %c0_i32, %c0_i32_0 : i32, i32
  }
  func.func @transform_5(%arg0: i32) -> (i32, i32) {
    %c0_i32 = arith.constant 0 : i32
    %c0_i32_0 = arith.constant 0 : i32
    %c0_i32_1 = arith.constant 0 : i32
    return %c0_i32, %c0_i32_0 : i32, i32
  }
  func.func @transform_6(%arg0: i32) -> (i32, i32) {
    %c0_i32 = arith.constant 0 : i32
    %c0_i32_0 = arith.constant 0 : i32
    %c0_i32_1 = arith.constant 0 : i32
    return %c0_i32, %c0_i32_0 : i32, i32
  }
  func.func @transform_7(%arg0: i32) -> (i32, i32) {
    %c0_i32 = arith.constant 0 : i32
    %c0_i32_0 = arith.constant 0 : i32
    %c0_i32_1 = arith.constant 0 : i32
    return %c0_i32, %c0_i32_0 : i32, i32
  }
  func.func @transform_8(%arg0: i32) -> (i32, i32) {
    %c0_i32 = arith.constant 0 : i32
    %c0_i32_0 = arith.constant 0 : i32
    %c0_i32_1 = arith.constant 0 : i32
    return %c0_i32, %c0_i32_0 : i32, i32
  }
  func.func @transform_9(%arg0: i32) -> (i32, i32) {
    %c0_i32 = arith.constant 0 : i32
    %c0_i32_0 = arith.constant 0 : i32
    return %arg0, %c0_i32 : i32, i32
  }
  func.func @transform_10(%arg0: i32) -> (i32, i32) {
    %c0_i32 = arith.constant 0 : i32
    %c0_i32_0 = arith.constant 0 : i32
    return %arg0, %c0_i32 : i32, i32
  }
}

</mosaic_0001>

<llo_original>
// kernel: tpu_custom_call.1
$region0: #{tpu_custom_call.1}
  #allocation0 [shape = 'u32[]', space=smem, size = 0x4, offset = 0x4, fixed_abs, tag = 'smem constant byte address 0x4 - core index']
  #allocation1 [shape = 'u32[144,128]{1,0:T(1,128)}', space=vmem, size = 0x12000, scoped, tag = 'internal scratch']
  %s0 = inlined_call_operand.hbm [shape: f32[8,128], index: 0, kind: input, shape index: {}]
  %s1 = inlined_call_operand.vmem [shape: f32[1,128], index: 1, kind: input, shape index: {}]
  %s2 = inlined_call_operand.vmem [shape: f32[1,128], index: 2, kind: input, shape index: {}]
  %s3 = inlined_call_operand.hbm [shape: bf16[128,128], index: 3, kind: input, shape index: {}]
  %s4 = inlined_call_operand.vmem [shape: f32[1,128], index: 4, kind: input, shape index: {}]
  %s5 = inlined_call_operand.hbm [shape: bf16[128,128], index: 5, kind: input, shape index: {}]
  %s6 = inlined_call_operand.vmem [shape: f32[1,128], index: 6, kind: input, shape index: {}]
  %s7 = inlined_call_operand.hbm [shape: bf16[128,256], index: 7, kind: input, shape index: {}]
  %s8 = inlined_call_operand.vmem [shape: f32[1,256], index: 8, kind: input, shape index: {}]
  %s9 = inlined_call_operand.hbm [shape: f32[8,128], index: 9, kind: output, shape index: {0}]
  %s10 = inlined_call_operand.hbm [shape: f32[8,128], index: 10, kind: output, shape index: {1}]
  %11 = xla_tuple %s9, %s10
  %s12 = sld [smem:[#allocation0]]
  $region70: #{tpu_custom_call.1} parent=0
    _
  %s14 = ssub.s32 1, %s12
  %s15 = scalar_select 0, %s14, %s12
  $region1: #{tpu_custom_call.1} parent=0
    #allocation2 [shape = 'u8[4096]{0}', space=vmem, size = 0x1000, scoped, tag = 'input window, operand 0, single buffered']
    #allocation3 [shape = 's32[1]{0}', space=sflag, size = 0x4, scoped, tag = 'scoped memory for tpu_custom_call.1']
    #allocation4 [shape = 's32[1]{0}', space=sflag, size = 0x4, scoped, tag = 'scoped memory for tpu_custom_call.1']
    #allocation5 [shape = 'u8[32768]{0}', space=vmem, size = 0x8000, scoped, tag = 'input window, operand 3, single buffered']
    #allocation6 [shape = 's32[1]{0}', space=sflag, size = 0x4, scoped, tag = 'scoped memory for tpu_custom_call.1']
    #allocation7 [shape = 'u8[32768]{0}', space=vmem, size = 0x8000, scoped, tag = 'input window, operand 5, single buffered']
    #allocation8 [shape = 'u8[65536]{0}', space=vmem, size = 0x10000, scoped, tag = 'input window, operand 7, single buffered']
    #allocation9 [shape = 's32[1]{0}', space=sflag, size = 0x4, scoped, tag = 'scoped memory for tpu_custom_call.1']
    #allocation10 [shape = 'u8[4096]{0}', space=vmem, size = 0x1000, scoped, tag = 'output window, operand 0, single buffered']
    #allocation11 [shape = 'u8[4096]{0}', space=vmem, size = 0x1000, scoped, tag = 'output window, operand 1, single buffered']
    #allocation12 [shape = 's32[1]{0}', space=sflag, size = 0x4, scoped, tag = 'scoped memory for tpu_custom_call.1']
    %16 = vsyncpa [#allocation3], 0
    %17 = vsyncpa [#allocation6], 0
    %18 = vsyncpa [#allocation9], 0
    %19 = vsyncpa [#allocation4], 0
    %20 = vsyncpa [#allocation12], 0
    // Predicated region
    $region2: #{tpu_custom_call.1} parent=1 // pred_check
      _
    $region3: #{tpu_custom_call.1} parent=1 // pred_check_branch
      %22 = sbr.rel (0) target = $region5
    $region4: #{tpu_custom_call.1} parent=1 // pred_region
      %s24 = ssub.s32 128, 128
      %25 = vsyncadd [#allocation3], %s24
      %s27 = sshll.u32 [#allocation2], 4
      %s28 = int_to_ptr.vmem [resolvable:$true] %s27
      %30 = dma.hbm_to_vmem [thread:$0]  %s0, 128, %s28, [#allocation3]
    $region5: #{tpu_custom_call.1} parent=1 // pred_fallthru
      _
    // Predicated region
    $region6: #{tpu_custom_call.1} parent=1 // pred_check
      _
    $region7: #{tpu_custom_call.1} parent=1 // pred_check_branch
      %32 = sbr.rel (0) target = $region9
    $region8: #{tpu_custom_call.1} parent=1 // pred_region
      _
    $region9: #{tpu_custom_call.1} parent=1 // pred_fallthru
      _
    // Predicated region
    $region10: #{tpu_custom_call.1} parent=1 // pred_check
      _
    $region11: #{tpu_custom_call.1} parent=1 // pred_check_branch
      %34 = sbr.rel (0) target = $region13
    $region12: #{tpu_custom_call.1} parent=1 // pred_region
      _
    $region13: #{tpu_custom_call.1} parent=1 // pred_fallthru
      _
    // Predicated region
    $region14: #{tpu_custom_call.1} parent=1 // pred_check
      _
    $region15: #{tpu_custom_call.1} parent=1 // pred_check_branch
      %36 = sbr.rel (0) target = $region17
    $region16: #{tpu_custom_call.1} parent=1 // pred_region
      %s38 = ssub.s32 1024, 1024
      %39 = vsyncadd [#allocation6], %s38
      %s40 = sshll.u32 [#allocation5], 4
      %s41 = int_to_ptr.vmem [resolvable:$true] %s40
      %46 = dma.hbm_to_vmem [thread:$0]  %s3, 1024, %s41, [#allocation6], 64, 64, 4
    $region17: #{tpu_custom_call.1} parent=1 // pred_fallthru
      _
    // Predicated region
    $region18: #{tpu_custom_call.1} parent=1 // pred_check
      _
    $region19: #{tpu_custom_call.1} parent=1 // pred_check_branch
      %48 = sbr.rel (0) target = $region21
    $region20: #{tpu_custom_call.1} parent=1 // pred_region
      _
    $region21: #{tpu_custom_call.1} parent=1 // pred_fallthru
      _
    // Predicated region
    $region22: #{tpu_custom_call.1} parent=1 // pred_check
      _
    $region23: #{tpu_custom_call.1} parent=1 // pred_check_branch
      %50 = sbr.rel (0) target = $region25
    $region24: #{tpu_custom_call.1} parent=1 // pred_region
      %s52 = ssub.s32 1024, 1024
      %53 = vsyncadd [#allocation6], %s52
      %s54 = sshll.u32 [#allocation7], 4
      %s55 = int_to_ptr.vmem [resolvable:$true] %s54
      %60 = dma.hbm_to_vmem [thread:$0]  %s5, 1024, %s55, [#allocation6], 64, 64, 4
    $region25: #{tpu_custom_call.1} parent=1 // pred_fallthru
      _
    // Predicated region
    $region26: #{tpu_custom_call.1} parent=1 // pred_check
      _
    $region27: #{tpu_custom_call.1} parent=1 // pred_check_branch
      %62 = sbr.rel (0) target = $region29
    $region28: #{tpu_custom_call.1} parent=1 // pred_region
      _
    $region29: #{tpu_custom_call.1} parent=1 // pred_fallthru
      _
    // Predicated region
    $region30: #{tpu_custom_call.1} parent=1 // pred_check
      _
    $region31: #{tpu_custom_call.1} parent=1 // pred_check_branch
      %64 = sbr.rel (0) target = $region33
    $region32: #{tpu_custom_call.1} parent=1 // pred_region
      %s66 = ssub.s32 2048, 2048
      %67 = vsyncadd [#allocation9], %s66
      %s68 = sshll.u32 [#allocation8], 4
      %s69 = int_to_ptr.vmem [resolvable:$true] %s68
      %74 = dma.hbm_to_vmem [thread:$0]  %s7, 2048, %s69, [#allocation9], 128, 128, 8
    $region33: #{tpu_custom_call.1} parent=1 // pred_fallthru
      _
    // Predicated region
    $region34: #{tpu_custom_call.1} parent=1 // pred_check
      _
    $region35: #{tpu_custom_call.1} parent=1 // pred_check_branch
      %76 = sbr.rel (0) target = $region37
    $region36: #{tpu_custom_call.1} parent=1 // pred_region
      _
    $region37: #{tpu_custom_call.1} parent=1 // pred_fallthru
      _
    // Predicated region
    $region38: #{tpu_custom_call.1} parent=1 // pred_check
      _
    $region39: #{tpu_custom_call.1} parent=1 // pred_check_branch
      %78 = sbr.rel (0) target = $region41
    $region40: #{tpu_custom_call.1} parent=1 // pred_region
      %79 = dma.done [#allocation3], 128
    $region41: #{tpu_custom_call.1} parent=1 // pred_fallthru
      _
    // Predicated region
    $region42: #{tpu_custom_call.1} parent=1 // pred_check
      _
    $region43: #{tpu_custom_call.1} parent=1 // pred_check_branch
      %81 = sbr.rel (0) target = $region45
    $region44: #{tpu_custom_call.1} parent=1 // pred_region
      %82 = dma.done [#allocation6], 1024
    $region45: #{tpu_custom_call.1} parent=1 // pred_fallthru
      _
    // Predicated region
    $region46: #{tpu_custom_call.1} parent=1 // pred_check
      _
    $region47: #{tpu_custom_call.1} parent=1 // pred_check_branch
      %84 = sbr.rel (0) target = $region49
    $region48: #{tpu_custom_call.1} parent=1 // pred_region
      %85 = dma.done [#allocation6], 1024
    $region49: #{tpu_custom_call.1} parent=1 // pred_fallthru
      _
    // Predicated region
    $region50: #{tpu_custom_call.1} parent=1 // pred_check
      _
    $region51: #{tpu_custom_call.1} parent=1 // pred_check_branch
      %87 = sbr.rel (0) target = $region53
    $region52: #{tpu_custom_call.1} parent=1 // pred_region
      %88 = dma.done [#allocation9], 2048
    $region53: #{tpu_custom_call.1} parent=1 // pred_fallthru
      _
    %v90 = vld [vmem:[#allocation2] sm:$0xff]
    %v91 = vld [vmem:[%s1] sm:$0x1]
    %v92 = vld [vmem:[%s2] sm:$0x1]
    %v94 = vlaneseq
    %v95 = vshrl.u32 %v94, 7
    %v96 = vsub.s32 0, %v95
    %v97 = vrot.slane %v91, %v96
    %v99 = vmul.f32 %v90, %v97
    %v100 = vpack.c.bf16 %v99, %v99
    %v101 = vld [vmem:[#allocation5] sm:$0xf]
    %v102 = vld [vmem:[#allocation5 + $0x4] sm:$0xf]
    %v103 = vld [vmem:[#allocation5 + $0x8] sm:$0xf]
    %v104 = vld [vmem:[#allocation5 + $0xc] sm:$0xf]
    %v105 = vld [vmem:[#allocation5 + $0x10] sm:$0xf]
    %v106 = vld [vmem:[#allocation5 + $0x14] sm:$0xf]
    %v107 = vld [vmem:[#allocation5 + $0x18] sm:$0xf]
    %v108 = vld [vmem:[#allocation5 + $0x1c] sm:$0xf]
    %v109 = vld [vmem:[#allocation5 + $0x20] sm:$0xf]
    %v110 = vld [vmem:[#allocation5 + $0x24] sm:$0xf]
    %v111 = vld [vmem:[#allocation5 + $0x28] sm:$0xf]
    %v112 = vld [vmem:[#allocation5 + $0x2c] sm:$0xf]
    %v113 = vld [vmem:[#allocation5 + $0x30] sm:$0xf]
    %v114 = vld [vmem:[#allocation5 + $0x34] sm:$0xf]
    %v115 = vld [vmem:[#allocation5 + $0x38] sm:$0xf]
    %v116 = vld [vmem:[#allocation5 + $0x3c] sm:$0xf]
    %v117 = vld [vmem:[%s4] sm:$0x1]
    %v119 = vlaneseq
    %v120 = vshrl.u32 %v119, 7
    %v121 = vsub.s32 0, %v120
    %v122 = vrot.slane %v117, %v121
    %v140 = vunpack.c.l.b16 %v101
    %v141 = vunpack.c.l.b16 %v102
    %v142 = vunpack.c.l.b16 %v103
    %v143 = vunpack.c.l.b16 %v104
    %v144 = vunpack.c.l.b16 %v105
    %v145 = vunpack.c.l.b16 %v106
    %v146 = vunpack.c.l.b16 %v107
    %v147 = vunpack.c.l.b16 %v108
    %v148 = vunpack.c.l.b16 %v109
    %v149 = vunpack.c.l.b16 %v110
    %v150 = vunpack.c.l.b16 %v111
    %v151 = vunpack.c.l.b16 %v112
    %v152 = vunpack.c.l.b16 %v113
    %v153 = vunpack.c.l.b16 %v114
    %v154 = vunpack.c.l.b16 %v115
    %v155 = vunpack.c.l.b16 %v116
    %v156 = vpack.c.b16 %v141, %v140
    %v157 = vpack.c.b16 %v143, %v142
    %v158 = vpack.c.b16 %v145, %v144
    %v159 = vpack.c.b16 %v147, %v146
    %v160 = vpack.c.b16 %v149, %v148
    %v161 = vpack.c.b16 %v151, %v150
    %v162 = vpack.c.b16 %v153, %v152
    %v163 = vpack.c.b16 %v155, %v154
    %172 = vmatprep.subr.bf16.mxu0 0
    %173 = vmatpush1.bf16.msra.mxu0 %v156
    %174 = vmatprep.subr.bf16.mxu0 0
    %175 = vmatpush1.bf16.msra.mxu0 %v157
    %176 = vmatprep.subr.bf16.mxu0 0
    %177 = vmatpush1.bf16.msra.mxu0 %v158
    %178 = vmatprep.subr.bf16.mxu0 0
    %179 = vmatpush1.bf16.msra.mxu0 %v159
    %180 = vmatprep.subr.bf16.mxu0 0
    %181 = vmatpush1.bf16.msra.mxu0 %v160
    %182 = vmatprep.subr.bf16.mxu0 0
    %183 = vmatpush1.bf16.msra.mxu0 %v161
    %184 = vmatprep.subr.bf16.mxu0 0
    %185 = vmatpush1.bf16.msra.mxu0 %v162
    %186 = vmatprep.subr.bf16.mxu0 0
    %187 = vmatpush1.bf16.msra.mxu0 %v163
    %188 = vmatprep.subr.bf16.mxu0 0
    %189 = vmatpush1.bf16.msra.mxu0 0
    %190 = vmatprep.subr.bf16.mxu0 0
    %191 = vmatpush1.bf16.msra.mxu0 0
    %192 = vmatprep.subr.bf16.mxu0 0
    %193 = vmatpush1.bf16.msra.mxu0 0
    %194 = vmatprep.subr.bf16.mxu0 0
    %195 = vmatpush1.bf16.msra.mxu0 0
    %196 = vmatprep.subr.bf16.mxu0 0
    %197 = vmatpush1.bf16.msra.mxu0 0
    %198 = vmatprep.subr.bf16.mxu0 0
    %199 = vmatpush1.bf16.msra.mxu0 0
    %200 = vmatprep.subr.bf16.mxu0 0
    %201 = vmatpush1.bf16.msra.mxu0 0
    %202 = vmatprep.subr.bf16.mxu0 0
    %203 = vmatpush1.bf16.msra.mxu0 0
    %204 = vmatprep.mubr.bf16.mxu0 0
    %205 = vmatmul.mubr.bf16.gmra.mrb[0].mxu0 %v100
    %v206 = vpop.f32.mrb[0].mxu0
    %v207 = vadd.f32 %v122, %v206
    %v208 = vpop.f32.mrb[0].mxu0
    %v209 = vpop.f32.mrb[0].mxu0
    %v210 = vpop.f32.mrb[0].mxu0
    %211 = vdwg.mxu0
    %vm212 = vcmp.gt.f32.partialorder %v207, 0.0
    %v213 = vmul.f32 %v207, 0.01
    %v214 = vsel %vm212, %v207, %v213
    %v215 = vpack.c.bf16 %v214, %v214
    %v216 = vld [vmem:[#allocation7] sm:$0xf]
    %v217 = vld [vmem:[#allocation7 + $0x4] sm:$0xf]
    %v218 = vld [vmem:[#allocation7 + $0x8] sm:$0xf]
    %v219 = vld [vmem:[#allocation7 + $0xc] sm:$0xf]
    %v220 = vld [vmem:[#allocation7 + $0x10] sm:$0xf]
    %v221 = vld [vmem:[#allocation7 + $0x14] sm:$0xf]
    %v222 = vld [vmem:[#allocation7 + $0x18] sm:$0xf]
    %v223 = vld [vmem:[#allocation7 + $0x1c] sm:$0xf]
    %v224 = vld [vmem:[#allocation7 + $0x20] sm:$0xf]
    %v225 = vld [vmem:[#allocation7 + $0x24] sm:$0xf]
    %v226 = vld [vmem:[#allocation7 + $0x28] sm:$0xf]
    %v227 = vld [vmem:[#allocation7 + $0x2c] sm:$0xf]
    %v228 = vld [vmem:[#allocation7 + $0x30] sm:$0xf]
    %v229 = vld [vmem:[#allocation7 + $0x34] sm:$0xf]
    %v230 = vld [vmem:[#allocation7 + $0x38] sm:$0xf]
    %v231 = vld [vmem:[#allocation7 + $0x3c] sm:$0xf]
    %v232 = vld [vmem:[%s6] sm:$0x1]
    %v234 = vlaneseq
    %v235 = vshrl.u32 %v234, 7
    %v236 = vsub.s32 0, %v235
    %v237 = vrot.slane %v232, %v236
    %v255 = vunpack.c.l.b16 %v216
    %v256 = vunpack.c.l.b16 %v217
    %v257 = vunpack.c.l.b16 %v218
    %v258 = vunpack.c.l.b16 %v219
    %v259 = vunpack.c.l.b16 %v220
    %v260 = vunpack.c.l.b16 %v221
    %v261 = vunpack.c.l.b16 %v222
    %v262 = vunpack.c.l.b16 %v223
    %v263 = vunpack.c.l.b16 %v224
    %v264 = vunpack.c.l.b16 %v225
    %v265 = vunpack.c.l.b16 %v226
    %v266 = vunpack.c.l.b16 %v227
    %v267 = vunpack.c.l.b16 %v228
    %v268 = vunpack.c.l.b16 %v229
    %v269 = vunpack.c.l.b16 %v230
    %v270 = vunpack.c.l.b16 %v231
    %v271 = vpack.c.b16 %v256, %v255
    %v272 = vpack.c.b16 %v258, %v257
    %v273 = vpack.c.b16 %v260, %v259
    %v274 = vpack.c.b16 %v262, %v261
    %v275 = vpack.c.b16 %v264, %v263
    %v276 = vpack.c.b16 %v266, %v265
    %v277 = vpack.c.b16 %v268, %v267
    %v278 = vpack.c.b16 %v270, %v269
    %287 = vmatprep.subr.bf16.mxu0 0
    %288 = vmatpush1.bf16.msra.mxu0 %v271
    %289 = vmatprep.subr.bf16.mxu0 0
    %290 = vmatpush1.bf16.msra.mxu0 %v272
    %291 = vmatprep.subr.bf16.mxu0 0
    %292 = vmatpush1.bf16.msra.mxu0 %v273
    %293 = vmatprep.subr.bf16.mxu0 0
    %294 = vmatpush1.bf16.msra.mxu0 %v274
    %295 = vmatprep.subr.bf16.mxu0 0
    %296 = vmatpush1.bf16.msra.mxu0 %v275
    %297 = vmatprep.subr.bf16.mxu0 0
    %298 = vmatpush1.bf16.msra.mxu0 %v276
    %299 = vmatprep.subr.bf16.mxu0 0
    %300 = vmatpush1.bf16.msra.mxu0 %v277
    %301 = vmatprep.subr.bf16.mxu0 0
    %302 = vmatpush1.bf16.msra.mxu0 %v278
    %303 = vmatprep.subr.bf16.mxu0 0
    %304 = vmatpush1.bf16.msra.mxu0 0
    %305 = vmatprep.subr.bf16.mxu0 0
    %306 = vmatpush1.bf16.msra.mxu0 0
    %307 = vmatprep.subr.bf16.mxu0 0
    %308 = vmatpush1.bf16.msra.mxu0 0
    %309 = vmatprep.subr.bf16.mxu0 0
    %310 = vmatpush1.bf16.msra.mxu0 0
    %311 = vmatprep.subr.bf16.mxu0 0
    %312 = vmatpush1.bf16.msra.mxu0 0
    %313 = vmatprep.subr.bf16.mxu0 0
    %314 = vmatpush1.bf16.msra.mxu0 0
    %315 = vmatprep.subr.bf16.mxu0 0
    %316 = vmatpush1.bf16.msra.mxu0 0
    %317 = vmatprep.subr.bf16.mxu0 0
    %318 = vmatpush1.bf16.msra.mxu0 0
    %319 = vmatprep.mubr.bf16.mxu0 0
    %320 = vmatmul.mubr.bf16.gmra.mrb[0].mxu0 %v215
    %v321 = vpop.f32.mrb[0].mxu0
    %v322 = vadd.f32 %v237, %v321
    %v323 = vpop.f32.mrb[0].mxu0
    %v324 = vpop.f32.mrb[0].mxu0
    %v325 = vpop.f32.mrb[0].mxu0
    %326 = vdwg.mxu0
    %vm327 = vcmp.gt.f32.partialorder %v322, 0.0
    %v328 = vmul.f32 %v322, 0.01
    %v329 = vsel %vm327, %v322, %v328
    %v330 = vpack.c.bf16 %v329, %v329
    %v331 = vld [vmem:[#allocation8] sm:$0xff]
    %v332 = vld [vmem:[#allocation8 + $0x8] sm:$0xff]
    %v333 = vld [vmem:[#allocation8 + $0x10] sm:$0xff]
    %v334 = vld [vmem:[#allocation8 + $0x18] sm:$0xff]
    %v335 = vld [vmem:[#allocation8 + $0x20] sm:$0xff]
    %v336 = vld [vmem:[#allocation8 + $0x28] sm:$0xff]
    %v337 = vld [vmem:[#allocation8 + $0x30] sm:$0xff]
    %v338 = vld [vmem:[#allocation8 + $0x38] sm:$0xff]
    %v339 = vld [vmem:[#allocation8 + $0x40] sm:$0xff]
    %v340 = vld [vmem:[#allocation8 + $0x48] sm:$0xff]
    %v341 = vld [vmem:[#allocation8 + $0x50] sm:$0xff]
    %v342 = vld [vmem:[#allocation8 + $0x58] sm:$0xff]
    %v343 = vld [vmem:[#allocation8 + $0x60] sm:$0xff]
    %v344 = vld [vmem:[#allocation8 + $0x68] sm:$0xff]
    %v345 = vld [vmem:[#allocation8 + $0x70] sm:$0xff]
    %v346 = vld [vmem:[#allocation8 + $0x78] sm:$0xff]
    %v347 = vld [vmem:[%s8] sm:$0x3]
    %v349 = vlaneseq
    %v350 = vshrl.u32 %v349, 7
    %v351 = vsub.s32 0, %v350
    %v352 = vrot.slane %v347, %v351
    %v353 = vlaneseq
    %v354 = vshrl.u32 %v353, 7
    %v355 = vsub.s32 1, %v354
    %v356 = vrot.slane %v347, %v355
    %v375 = vunpack.c.l.b16 %v331
    %v376 = vunpack.c.h.b16 %v331
    %v377 = vunpack.c.l.b16 %v332
    %v378 = vunpack.c.h.b16 %v332
    %v379 = vunpack.c.l.b16 %v333
    %v380 = vunpack.c.h.b16 %v333
    %v381 = vunpack.c.l.b16 %v334
    %v382 = vunpack.c.h.b16 %v334
    %v383 = vunpack.c.l.b16 %v335
    %v384 = vunpack.c.h.b16 %v335
    %v385 = vunpack.c.l.b16 %v336
    %v386 = vunpack.c.h.b16 %v336
    %v387 = vunpack.c.l.b16 %v337
    %v388 = vunpack.c.h.b16 %v337
    %v389 = vunpack.c.l.b16 %v338
    %v390 = vunpack.c.h.b16 %v338
    %v391 = vunpack.c.l.b16 %v339
    %v392 = vunpack.c.h.b16 %v339
    %v393 = vunpack.c.l.b16 %v340
    %v394 = vunpack.c.h.b16 %v340
    %v395 = vunpack.c.l.b16 %v341
    %v396 = vunpack.c.h.b16 %v341
    %v397 = vunpack.c.l.b16 %v342
    %v398 = vunpack.c.h.b16 %v342
    %v399 = vunpack.c.l.b16 %v343
    %v400 = vunpack.c.h.b16 %v343
    %v401 = vunpack.c.l.b16 %v344
    %v402 = vunpack.c.h.b16 %v344
    %v403 = vunpack.c.l.b16 %v345
    %v404 = vunpack.c.h.b16 %v345
    %v405 = vunpack.c.l.b16 %v346
    %v406 = vunpack.c.h.b16 %v346
    %v407 = vpack.c.b16 %v377, %v375
    %v408 = vpack.c.b16 %v378, %v376
    %v409 = vpack.c.b16 %v381, %v379
    %v410 = vpack.c.b16 %v382, %v380
    %v411 = vpack.c.b16 %v385, %v383
    %v412 = vpack.c.b16 %v386, %v384
    %v413 = vpack.c.b16 %v389, %v387
    %v414 = vpack.c.b16 %v390, %v388
    %v415 = vpack.c.b16 %v393, %v391
    %v416 = vpack.c.b16 %v394, %v392
    %v417 = vpack.c.b16 %v397, %v395
    %v418 = vpack.c.b16 %v398, %v396
    %v419 = vpack.c.b16 %v401, %v399
    %v420 = vpack.c.b16 %v402, %v400
    %v421 = vpack.c.b16 %v405, %v403
    %v422 = vpack.c.b16 %v406, %v404
    %439 = vmatprep.subr.bf16.mxu0 %v408
    %440 = vmatpush1.bf16.msra.mxu0 %v407
    %441 = vmatprep.subr.bf16.mxu0 %v410
    %442 = vmatpush1.bf16.msra.mxu0 %v409
    %443 = vmatprep.subr.bf16.mxu0 %v412
    %444 = vmatpush1.bf16.msra.mxu0 %v411
    %445 = vmatprep.subr.bf16.mxu0 %v414
    %446 = vmatpush1.bf16.msra.mxu0 %v413
    %447 = vmatprep.subr.bf16.mxu0 %v416
    %448 = vmatpush1.bf16.msra.mxu0 %v415
    %449 = vmatprep.subr.bf16.mxu0 %v418
    %450 = vmatpush1.bf16.msra.mxu0 %v417
    %451 = vmatprep.subr.bf16.mxu0 %v420
    %452 = vmatpush1.bf16.msra.mxu0 %v419
    %453 = vmatprep.subr.bf16.mxu0 %v422
    %454 = vmatpush1.bf16.msra.mxu0 %v421
    %455 = vmatprep.subr.bf16.mxu0 0
    %456 = vmatpush1.bf16.msra.mxu0 0
    %457 = vmatprep.subr.bf16.mxu0 0
    %458 = vmatpush1.bf16.msra.mxu0 0
    %459 = vmatprep.subr.bf16.mxu0 0
    %460 = vmatpush1.bf16.msra.mxu0 0
    %461 = vmatprep.subr.bf16.mxu0 0
    %462 = vmatpush1.bf16.msra.mxu0 0
    %463 = vmatprep.subr.bf16.mxu0 0
    %464 = vmatpush1.bf16.msra.mxu0 0
    %465 = vmatprep.subr.bf16.mxu0 0
    %466 = vmatpush1.bf16.msra.mxu0 0
    %467 = vmatprep.subr.bf16.mxu0 0
    %468 = vmatpush1.bf16.msra.mxu0 0
    %469 = vmatprep.subr.bf16.mxu0 0
    %470 = vmatpush1.bf16.msra.mxu0 0
    %471 = vmatprep.mubr.bf16.mxu0 0
    %472 = vmatmul.mubr.bf16.gmra.mrb[0].mxu0 %v330
    %v473 = vpop.f32.mrb[0].mxu0
    %v474 = vadd.f32 %v352, %v473
    %v475 = vpop.f32.mrb[0].mxu0
    %v476 = vadd.f32 %v356, %v475
    %v477 = vpop.f32.mrb[0].mxu0
    %v478 = vpop.f32.mrb[0].mxu0
    %479 = vdwg.mxu0
    %v481 = vlaneseq
    %v482 = vshrl.u32 %v481, 7
    %v483 = vsub.s32 0, %v482
    %v484 = vrot.slane %v92, %v483
    %v486 = vmul.f32 %v474, %v484
    %v487 = vsub.f32 1.0, %v91
    %v488 = vmul.f32 %v486, 1.442695
    %v489 = vpow.pop %v488
    %v490 = vmul.f32 %v90, %v489
    %v491 = vadd.f32 %v490, %v476
    %v493 = vlaneseq
    %v494 = vshrl.u32 %v493, 7
    %v495 = vsub.s32 0, %v494
    %v496 = vrot.slane %v487, %v495
    %v498 = vmul.f32 %v496, %v491
    %v499 = vadd.f32 %v99, %v498
    %500 = vst [vmem:[#allocation10] sm:$0xff] %v499
    %v501 = vmul.f32 %v496, %v486
    %502 = vadd.xlane.f32.xlu0 %v501
    %v503 = vpop.xlane.xlu0 %502
    %504 = vst [vmem:[#allocation11] sm:$0xff] %v503
    // Predicated region
    $region54: #{tpu_custom_call.1} parent=1 // pred_check
      _
    $region55: #{tpu_custom_call.1} parent=1 // pred_check_branch
      %506 = sbr.rel (0) target = $region57
    $region56: #{tpu_custom_call.1} parent=1 // pred_region
      %s508 = ssub.s32 128, 128
      %509 = vsyncadd [#allocation4], %s508
      %s511 = sshll.u32 [#allocation10], 4
      %s512 = int_to_ptr.vmem [resolvable:$true] %s511
      %514 = dma.vmem_to_hbm [thread:$0]  %s512, 128, %s9, [#allocation4]
    $region57: #{tpu_custom_call.1} parent=1 // pred_fallthru
      _
    // Predicated region
    $region58: #{tpu_custom_call.1} parent=1 // pred_check
      _
    $region59: #{tpu_custom_call.1} parent=1 // pred_check_branch
      %516 = sbr.rel (0) target = $region61
    $region60: #{tpu_custom_call.1} parent=1 // pred_region
      %s518 = ssub.s32 128, 128
      %519 = vsyncadd [#allocation12], %s518
      %s521 = sshll.u32 [#allocation11], 4
      %s522 = int_to_ptr.vmem [resolvable:$true] %s521
      %524 = dma.vmem_to_hbm [thread:$0]  %s522, 128, %s10, [#allocation12]
    $region61: #{tpu_custom_call.1} parent=1 // pred_fallthru
      _
    // Predicated region
    $region62: #{tpu_custom_call.1} parent=1 // pred_check
      _
    $region63: #{tpu_custom_call.1} parent=1 // pred_check_branch
      %526 = sbr.rel (0) target = $region65
    $region64: #{tpu_custom_call.1} parent=1 // pred_region
      %527 = dma.done [#allocation4], 128
    $region65: #{tpu_custom_call.1} parent=1 // pred_fallthru
      _
    // Predicated region
    $region66: #{tpu_custom_call.1} parent=1 // pred_check
      _
    $region67: #{tpu_custom_call.1} parent=1 // pred_check_branch
      %529 = sbr.rel (0) target = $region69
    $region68: #{tpu_custom_call.1} parent=1 // pred_region
      %530 = dma.done [#allocation12], 128
    $region69: #{tpu_custom_call.1} parent=1 // pred_fallthru
      _
    %531 = vsyncpa [#allocation3], 1
    %532 = vsyncpa [#allocation6], 1
    %533 = vsyncpa [#allocation9], 1
    %534 = vsyncpa [#allocation4], 1
    %535 = vsyncpa [#allocation12], 1

</llo_original>
